<compile_context>
chip_gen: v7x
topology: tpu7x:2x2x1
jax: 0.10.0
libtpu: 0.0.40
codegen_flags: <defaults>
</compile_context>

<pallas_src>
import math

import jax
import jax.numpy as jnp
from jax.experimental import pallas as pl
from jax.experimental.pallas import tpu as pltpu


# ---------------------------------------------------------------------------
# Primary path: zero-traffic aliased kernel (no data movement).
# ---------------------------------------------------------------------------
def _touch_kernel(x_ref, o_ref):
    # Output aliases the input buffer; nothing to move.  touch() only pins
    # ordering so the aliased output materializes after this kernel.
    pltpu.touch(x_ref)
    pltpu.touch(o_ref)


def _flatten_alias(x2):
    rows, cols = x2.shape
    return pl.pallas_call(
        _touch_kernel,
        out_shape=jax.ShapeDtypeStruct((rows, cols), x2.dtype),
        in_specs=[pl.BlockSpec(memory_space=pl.ANY)],
        out_specs=pl.BlockSpec(memory_space=pl.ANY),
        input_output_aliases={0: 0},
        compiler_params=pltpu.CompilerParams(has_side_effects=True),
        cost_estimate=pl.CostEstimate(flops=0, transcendentals=0,
                                      bytes_accessed=0),
    )(x2)


# ---------------------------------------------------------------------------
# Fallback path: lane-dense tiled HBM copy (only used if the zero-copy kernel
# cannot lower on this toolchain).
# TODO(synk): this could also be a single HBM->HBM pltpu.make_async_copy
# (pl.ANY in/out + SemaphoreType.DMA scratch) to skip VMEM staging entirely.
# ---------------------------------------------------------------------------
def _copy_kernel(x_ref, o_ref):
    # Unmasked, lane/sublane-dense vld/vst copy of one (bm, bn) tile.
    o_ref[...] = x_ref[...]


_SUBLANE_MULT = {1: 32, 2: 16, 4: 8, 8: 8}   # packed sublanes per dtype width


def _slab_shape(total, rows0, cols0):
    """Batch-agnostic (rows, L) slab, L a multiple of 128; prefer >= 8 rows."""
    for min_rows in (8, 1):
        for L in (1024, 512, 256, 128):
            if total % L == 0 and total // L >= min_rows:
                return total // L, L
    return rows0, cols0            # fall back to the raw (B, flat) shape


def _copy_tiling(rows, cols, itemsize):
    sub = _SUBLANE_MULT.get(itemsize, 8)
    target_elems = (8 << 20) // itemsize              # ~8 MiB per block
    # Lane (last) dim first: keep it as wide as possible (unmasked vst).
    if cols <= 128 or cols * itemsize <= (8 << 20):
        bn = cols                                     # full extent is allowed
    else:
        bn = max(128, min((cols // 128) * 128,
                          (target_elems // sub // 128) * 128))
    # Sublane dim from the remaining byte budget, dtype-packing aligned.
    bm = max(sub, (target_elems // max(bn, 1)) // sub * sub)
    if bm >= rows:
        bm = rows                                     # full extent
    # v7x has two TensorCores: make sure >= 2 parallel blocks when cheap.
    if bm >= rows and bn >= cols and rows >= 2 * sub:
        bm = ((rows + 1) // 2 + sub - 1) // sub * sub
    return bm, bn


def _flatten_copy(x2):
    rows0, cols0 = x2.shape
    total = rows0 * cols0
    itemsize = jnp.dtype(x2.dtype).itemsize

    rows, cols = _slab_shape(total, rows0, cols0)
    slab = x2.reshape(rows, cols)                     # metadata-only
    bm, bn = _copy_tiling(rows, cols, itemsize)
    grid = (pl.cdiv(rows, bm), pl.cdiv(cols, bn))

    block_bytes = bm * bn * itemsize
    # in+out, double-buffered, plus headroom; capped well below v7x's 64 MiB.
    vmem_limit = min(max(4 * block_bytes + (4 << 20), 16 << 20), 48 << 20)

    out = pl.pallas_call(
        _copy_kernel,
        out_shape=jax.ShapeDtypeStruct((rows, cols), x2.dtype),
        grid=grid,
        in_specs=[pl.BlockSpec((bm, bn), lambda i, j: (i, j))],
        out_specs=pl.BlockSpec((bm, bn), lambda i, j: (i, j)),
        compiler_params=pltpu.CompilerParams(
            dimension_semantics=("parallel", "parallel"),
            vmem_limit_bytes=vmem_limit,
        ),
        cost_estimate=pl.CostEstimate(flops=0, transcendentals=0,
                                      bytes_accessed=2 * total * itemsize),
    )(slab)
    return out.reshape(rows0, cols0)                  # metadata-only


# ---------------------------------------------------------------------------
# Public wrapper (forward semantics of the PyTorch module).
# ---------------------------------------------------------------------------
_ALIAS_PATH_OK = None   # None = untried; cached True/False after first attempt


def flatten_pallas(x, full: bool = False):
    """Equivalent of cvpods Flatten.forward for NCHW (or any-rank) input x."""
    global _ALIAS_PATH_OK
    B = x.shape[0]
    flat = math.prod(x.shape[1:])
    x2 = x.reshape(B, flat)                           # metadata-only if contiguous

    out = None
    if _ALIAS_PATH_OK is not False:
        try:
            out = _flatten_alias(x2)                  # zero-traffic path
            _ALIAS_PATH_OK = True
        except Exception:
            _ALIAS_PATH_OK = False
    if out is None:
        out = _flatten_copy(x2)                       # HBM-roofline copy fallback

    return out.reshape(-1) if full else out


class Flatten:
    """Drop-in analogue of the PyTorch Flatten module."""

    def __init__(self, full: bool = False):
        self.full = full

    def __call__(self, x):
        return flatten_pallas(x, full=self.full)


if __name__ == "__main__":
    key = jax.random.PRNGKey(0)
    B, C, H, W = 2, 4, 16, 16
    x = jax.random.normal(key, (B, C, H, W), dtype=jnp.float32)

    ref2d = x.reshape(B, -1)
    ref1d = x.reshape(-1)

    # full=False: (B, C*H*W)
    y = jax.block_until_ready(flatten_pallas(x, full=False))
    assert y.shape == (B, C * H * W), y.shape
    assert jnp.array_equal(y, ref2d), "mismatch for full=False"

    # full=True: (B*C*H*W,)
    y_full = jax.block_until_ready(Flatten(full=True)(x))
    assert y_full.shape == (B * C * H * W,), y_full.shape
    assert jnp.array_equal(y_full, ref1d), "mismatch for full=True"

    # Also exercise the tiled-copy fallback explicitly so both paths are valid.
    y_copy = jax.block_until_ready(_flatten_copy(x.reshape(B, -1)))
    assert jnp.array_equal(y_copy, ref2d), "mismatch for copy fallback"

    print("KERNEL_OK")
</pallas_src>

<mosaic_0001>
module attributes {stable_mosaic.version = 11 : i64} {
  func.func @_touch_kernel(%arg0: memref<2x1024xf32, #tpu.memory_space<any>>, %arg1: memref<2x1024xf32, #tpu.memory_space<any>>) attributes {dimension_semantics = [], scalar_prefetch = 0 : i64, scratch_operands = 0 : i64, tpu.core_type = #tpu.core_type<tc>} {
    return
  }
}

module attributes {stable_mosaic.version = 11 : i64} {
  func.func @_copy_kernel(%arg0: i32, %arg1: i32, %arg2: memref<8x256xf32, #tpu.memory_space<vmem>>, %arg3: memref<8x256xf32, #tpu.memory_space<vmem>>) attributes {dimension_semantics = [#tpu.dimension_semantics<parallel>, #tpu.dimension_semantics<parallel>], iteration_bounds = array<i64: 1, 1>, scalar_prefetch = 0 : i64, scratch_operands = 0 : i64, tpu.core_type = #tpu.core_type<tc>, window_params = [{transform_indices = @transform_0, window_bounds = array<i64: 8, 256>}, {transform_indices = @transform_1, window_bounds = array<i64: 8, 256>}]} {
    %c0 = arith.constant 0 : index
    %c0_0 = arith.constant 0 : index
    %0 = vector.load %arg2[%c0, %c0_0] : memref<8x256xf32, #tpu.memory_space<vmem>>, vector<8x256xf32>
    %c0_1 = arith.constant 0 : index
    %c0_2 = arith.constant 0 : index
    %1 = vector.load %arg3[%c0_1, %c0_2] : memref<8x256xf32, #tpu.memory_space<vmem>>, vector<8x256xf32>
    tpu.vector_store %arg3[%c0_1, %c0_2], %0 {strides = array<i32>} : memref<8x256xf32, #tpu.memory_space<vmem>>, vector<8x256xf32>,
    return
  }
  func.func @transform_0(%arg0: i32, %arg1: i32) -> (i32, i32) {
    %c0_i32 = arith.constant 0 : i32
    return %arg0, %arg1 : i32, i32
  }
  func.func @transform_1(%arg0: i32, %arg1: i32) -> (i32, i32) {
    %c0_i32 = arith.constant 0 : i32
    return %arg0, %arg1 : i32, i32
  }
}

</mosaic_0001>

<llo_original>
// kernel: tpu_custom_call.1
$region0: #{tpu_custom_call.1}
  #allocation0 [shape = 'u32[]', space=smem, size = 0x4, offset = 0x4, fixed_abs, tag = 'smem constant byte address 0x4 - core index']
  #allocation1 [shape = 'u32[144,128]{1,0:T(1,128)}', space=vmem, size = 0x12000, scoped, tag = 'internal scratch']
  %s0 = inlined_call_operand.hbm [shape: f32[2,1024], index: 0, kind: input, shape index: {}, may-alias: {0,1}]
  %s1 = inlined_call_operand.hbm [shape: f32[2,1024], index: 1, kind: output, shape index: {}, may-alias: {0,1}]
  %s2 = sld [smem:[#allocation0]]
  $region2: #{tpu_custom_call.1} parent=0
    _
  %s4 = ssub.s32 1, %s2
  %s5 = scalar_select 0, %s4, %s2

// kernel: tpu_custom_call.1
$region0: #{tpu_custom_call.1}
  #allocation0 [shape = 'u32[]', space=smem, size = 0x4, offset = 0x4, fixed_abs, tag = 'smem constant byte address 0x4 - core index']
  #allocation1 [shape = 'u32[144,128]{1,0:T(1,128)}', space=vmem, size = 0x12000, scoped, tag = 'internal scratch']
  %s0 = inlined_call_operand.hbm [shape: f32[8,256], index: 0, kind: input, shape index: {}]
  %s1 = inlined_call_operand.hbm [shape: f32[8,256], index: 1, kind: output, shape index: {}]
  %s2 = sld [smem:[#allocation0]]
  $region18: #{tpu_custom_call.1} parent=0
    _
  %s4 = ssub.s32 1, %s2
  %s5 = scalar_select 0, %s4, %s2
  $region1: #{tpu_custom_call.1} parent=0
    #allocation2 [shape = 'u8[8192]{0}', space=vmem, size = 0x2000, scoped, tag = 'input window, operand 0, single buffered']
    #allocation3 [shape = 's32[1]{0}', space=sflag, size = 0x4, scoped, tag = 'scoped memory for tpu_custom_call.1']
    #allocation4 [shape = 's32[1]{0}', space=sflag, size = 0x4, scoped, tag = 'scoped memory for tpu_custom_call.1']
    #allocation5 [shape = 'u8[8192]{0}', space=vmem, size = 0x2000, scoped, tag = 'output window, operand 0, single buffered']
    %6 = vsyncpa [#allocation3], 0
    %7 = vsyncpa [#allocation4], 0
    // Predicated region
    $region2: #{tpu_custom_call.1} parent=1 // pred_check
      _
    $region3: #{tpu_custom_call.1} parent=1 // pred_check_branch
      %9 = sbr.rel (0) target = $region5
    $region4: #{tpu_custom_call.1} parent=1 // pred_region
      %s11 = ssub.s32 256, 256
      %12 = vsyncadd [#allocation3], %s11
      %s14 = sshll.u32 [#allocation2], 4
      %s15 = int_to_ptr.vmem [resolvable:$true] %s14
      %17 = dma.hbm_to_vmem [thread:$0]  %s0, 256, %s15, [#allocation3]
    $region5: #{tpu_custom_call.1} parent=1 // pred_fallthru
      _
    // Predicated region
    $region6: #{tpu_custom_call.1} parent=1 // pred_check
      _
    $region7: #{tpu_custom_call.1} parent=1 // pred_check_branch
      %19 = sbr.rel (0) target = $region9
    $region8: #{tpu_custom_call.1} parent=1 // pred_region
      %20 = dma.done [#allocation3], 256
    $region9: #{tpu_custom_call.1} parent=1 // pred_fallthru
      _
    %v21 = vld [vmem:[#allocation2] sm:$0xff]
    %v22 = vld [vmem:[#allocation2 + $0x8] sm:$0xff]
    %23 = vst [vmem:[#allocation5] sm:$0xff] %v21
    %24 = vst [vmem:[#allocation5 + $0x8] sm:$0xff] %v22
    // Predicated region
    $region10: #{tpu_custom_call.1} parent=1 // pred_check
      _
    $region11: #{tpu_custom_call.1} parent=1 // pred_check_branch
      %26 = sbr.rel (0) target = $region13
    $region12: #{tpu_custom_call.1} parent=1 // pred_region
      %s28 = ssub.s32 256, 256
      %29 = vsyncadd [#allocation4], %s28
      %s31 = sshll.u32 [#allocation5], 4
      %s32 = int_to_ptr.vmem [resolvable:$true] %s31
      %34 = dma.vmem_to_hbm [thread:$0]  %s32, 256, %s1, [#allocation4]
    $region13: #{tpu_custom_call.1} parent=1 // pred_fallthru
      _
    // Predicated region
    $region14: #{tpu_custom_call.1} parent=1 // pred_check
      _
    $region15: #{tpu_custom_call.1} parent=1 // pred_check_branch
      %36 = sbr.rel (0) target = $region17
    $region16: #{tpu_custom_call.1} parent=1 // pred_region
      %37 = dma.done [#allocation4], 256
    $region17: #{tpu_custom_call.1} parent=1 // pred_fallthru
      _
    %38 = vsyncpa [#allocation3], 1
    %39 = vsyncpa [#allocation4], 1

</llo_original>
